<compile_context>
chip_gen: v7x
topology: tpu7x:2x2x1
jax: 0.10.0
libtpu: 0.0.40
codegen_flags: <defaults>
</compile_context>

<pallas_src>
import functools
import math

import jax
import jax.numpy as jnp
from jax import lax
from jax.experimental import pallas as pl
from jax.experimental.pallas import tpu as pltpu

_GOLDEN = 0x9E3779B9
_TARGET_TILE_BYTES = 2 * 1024 * 1024   # per input tile; safe for v5e/v6e/v7x
_VMEM_LIMIT_BYTES = 32 * 1024 * 1024   # explicit scoped-VMEM budget


# ------------------------------------------------------------------ RNG utils
def _mix32_py(x: int) -> int:
    """lowbias32 avalanche hash on a Python int (mod 2**32)."""
    x &= 0xFFFFFFFF
    x ^= x >> 16
    x = (x * 0x7FEB352D) & 0xFFFFFFFF
    x ^= x >> 15
    x = (x * 0x846CA68B) & 0xFFFFFFFF
    x ^= x >> 16
    return x


def _mix32(x):
    """lowbias32 avalanche hash on a uint32 array (in-kernel)."""
    x = x ^ (x >> jnp.uint32(16))
    x = x * jnp.uint32(0x7FEB352D)
    x = x ^ (x >> jnp.uint32(15))
    x = x * jnp.uint32(0x846CA68B)
    x = x ^ (x >> jnp.uint32(16))
    return x


def _uniform01(bits_u32):
    """uint32 bits -> float32 uniform in the open interval (0, 1)."""
    v = (bits_u32 & jnp.uint32(0x7FFFFF)).astype(jnp.int32).astype(jnp.float32)
    return (v + 0.5) * jnp.float32(1.0 / (1 << 23))


def _gaussian(shape, base_idx, key):
    """Standard-normal noise for a (rows, cols) tile via counter hash + Box-Muller."""
    r = lax.broadcasted_iota(jnp.int32, shape, 0)
    c = lax.broadcasted_iota(jnp.int32, shape, 1)
    idx = (base_idx + r * shape[1] + c).astype(jnp.uint32)
    ctr = idx << jnp.uint32(1)                       # even counter per element
    k = jnp.uint32(key)
    u1 = _uniform01(_mix32(ctr ^ k))                 # counter 2*idx
    u2 = _uniform01(_mix32((ctr | jnp.uint32(1)) ^ k))  # counter 2*idx+1
    rad = jnp.sqrt(jnp.float32(-2.0) * jnp.log(u1))
    ang = jnp.float32(2.0 * math.pi) * u2
    return rad * jnp.cos(ang)


# ------------------------------------------------------------------ kernels
def _noise_kernel(x_ref, o_ref, *, key, mean, std, block_elems):
    base = pl.program_id(0) * block_elems
    z = _gaussian(x_ref.shape, base, key)
    noise = jnp.float32(mean) + jnp.float32(std) * z
    o_ref[...] = (x_ref[...].astype(jnp.float32) + noise).astype(o_ref.dtype)


def _masked_noise_kernel(m_ref, x_ref, o_ref, *, key, mean, std, block_elems):
    base = pl.program_id(0) * block_elems
    z = _gaussian(x_ref.shape, base, key)
    noise = jnp.float32(mean) + jnp.float32(std) * z
    xv = x_ref[...]
    noisy = (xv.astype(jnp.float32) + noise).astype(o_ref.dtype)
    # mask broadcasts: (block_rows, 1) or (block_rows, C).  Unmasked rows stay
    # bit-exact equal to x.
    o_ref[...] = jnp.where(m_ref[...] != 0, noisy, xv)


# ------------------------------------------------------------------ helpers
def _pick_block_rows(num_rows, row_bytes, multiple):
    """Largest row tile (multiple of `multiple`) targeting ~2 MiB per input tile."""
    if num_rows <= multiple:
        return num_rows                     # single full-dim block
    br = max(multiple, _TARGET_TILE_BYTES // max(row_bytes, 1))
    br = min(br, num_rows)
    return max(multiple, (br // multiple) * multiple)


def _compiler_params():
    return pltpu.CompilerParams(
        dimension_semantics=("parallel",),   # blocks independent -> megacore on v7x
        vmem_limit_bytes=_VMEM_LIMIT_BYTES,
    )


# ------------------------------------------------------------------ wrapper
def noise_layer(x, where=None, *, seed=0, training=True, mean=0.0, variance=0.1):
    """Pallas implementation of NoiseLayer.forward."""
    if variance == 0:
        raise ValueError("Variance should not be 0")
    if not training:
        return x

    std = math.sqrt(variance)
    key = _mix32_py((int(seed) & 0xFFFFFFFF) ^ _GOLDEN)   # full avalanche of the seed

    x = jnp.asarray(x)
    orig_shape = x.shape
    dtype = x.dtype
    n_elems = x.size
    if n_elems == 0:
        return x
    itemsize = dtype.itemsize

    if where is not None:
        where = jnp.asarray(where)

    # ---- Path 1: masked, lane-friendly last dim -> compact per-row mask -----
    use_compact = (
        where is not None
        and x.ndim >= 2
        and where.ndim < x.ndim
        and orig_shape[-1] >= 128
        and orig_shape[-1] % 128 == 0
    )
    if use_compact:
        hidden = orig_shape[-1]
        lead = orig_shape[:-1]
        rows = n_elems // hidden
        w = where.reshape(where.shape + (1,) * (len(lead) - where.ndim))
        m_row = jnp.broadcast_to(w, lead).reshape(rows, 1).astype(jnp.int32)
        x2 = x.reshape(rows, hidden)

        block_rows = _pick_block_rows(rows, hidden * itemsize, 8)
        grid = (pl.cdiv(rows, block_rows),)
        kernel = functools.partial(
            _masked_noise_kernel, key=key, mean=mean, std=std,
            block_elems=block_rows * hidden)

        out = pl.pallas_call(
            kernel,
            out_shape=jax.ShapeDtypeStruct((rows, hidden), dtype),
            grid=grid,
            in_specs=[
                pl.BlockSpec((block_rows, 1), lambda i: (i, 0)),       # compact mask
                pl.BlockSpec((block_rows, hidden), lambda i: (i, 0)),  # x
            ],
            out_specs=pl.BlockSpec((block_rows, hidden), lambda i: (i, 0)),
            compiler_params=_compiler_params(),
        )(m_row, x2)
        return out.reshape(orig_shape)

    # ---- Path 2: lane-dense flat slab (unmasked, or small/odd last dim) -----
    xf = x.reshape(-1)
    if where is None:
        mf = None
    else:
        w = where.reshape(where.shape + (1,) * (x.ndim - where.ndim))
        mf = jnp.broadcast_to(w, orig_shape).reshape(-1).astype(jnp.int8)

    if n_elems >= 512:
        lanes = 512
    elif n_elems >= 128:
        lanes = 128
    else:
        lanes = n_elems
    pad = (-n_elems) % lanes
    if pad:
        xf = jnp.pad(xf, (0, pad))
        if mf is not None:
            mf = jnp.pad(mf, (0, pad))
    rows = (n_elems + pad) // lanes
    x2 = xf.reshape(rows, lanes)

    # multiple of 32 rows when an int8 mask rides along (native i8 tiling).
    multiple = 32 if mf is not None else 8
    block_rows = _pick_block_rows(rows, lanes * itemsize, multiple)
    grid = (pl.cdiv(rows, block_rows),)
    block_elems = block_rows * lanes

    if mf is None:
        kernel = functools.partial(
            _noise_kernel, key=key, mean=mean, std=std, block_elems=block_elems)
        out = pl.pallas_call(
            kernel,
            out_shape=jax.ShapeDtypeStruct((rows, lanes), dtype),
            grid=grid,
            in_specs=[pl.BlockSpec((block_rows, lanes), lambda i: (i, 0))],
            out_specs=pl.BlockSpec((block_rows, lanes), lambda i: (i, 0)),
            compiler_params=_compiler_params(),
        )(x2)
    else:
        m2 = mf.reshape(rows, lanes)
        kernel = functools.partial(
            _masked_noise_kernel, key=key, mean=mean, std=std, block_elems=block_elems)
        out = pl.pallas_call(
            kernel,
            out_shape=jax.ShapeDtypeStruct((rows, lanes), dtype),
            grid=grid,
            in_specs=[
                pl.BlockSpec((block_rows, lanes), lambda i: (i, 0)),   # int8 mask
                pl.BlockSpec((block_rows, lanes), lambda i: (i, 0)),   # x
            ],
            out_specs=pl.BlockSpec((block_rows, lanes), lambda i: (i, 0)),
            compiler_params=_compiler_params(),
        )(m2, x2)

    out = out.reshape(-1)
    if pad:
        out = out[:n_elems]
    return out.reshape(orig_shape)


# ------------------------------------------------------------------ demo/test
if __name__ == "__main__":
    key = jax.random.PRNGKey(0)
    kx, kw, kx2 = jax.random.split(key, 3)

    B, S, H = 2, 8, 32
    x = jax.random.normal(kx, (B, S, H), dtype=jnp.float32)
    where = jax.random.bernoulli(kw, 0.5, (B, S))   # mask over leading dims

    y_masked = noise_layer(x, where, seed=123, training=True)   # lane-dense + i8 mask
    y_full = noise_layer(x, None, seed=7, training=True)        # lane-dense, no mask
    y_eval = noise_layer(x, where, training=False)              # identity

    # Lane-friendly hidden size + bf16 exercises the compact per-row-mask path.
    H2 = 128
    x2 = jax.random.normal(kx2, (B, S, H2)).astype(jnp.bfloat16)
    y2 = noise_layer(x2, where, seed=3, training=True)

    jax.block_until_ready((y_masked, y_full, y_eval, y2))

    assert y_masked.shape == x.shape and y_masked.dtype == x.dtype
    assert y_full.shape == x.shape and y_full.dtype == x.dtype

    # Positions where mask is False must be untouched (bit-exact).
    mask3 = jnp.broadcast_to(where[..., None], x.shape)
    assert bool(jnp.all(jnp.where(mask3, True, y_masked == x)))
    # Positions where mask is True should (with prob ~1) differ from x.
    assert bool(jnp.any(jnp.where(mask3, y_masked != x, False))) or not bool(jnp.any(mask3))
    # Unmasked variant: noise everywhere, finite, roughly the right scale.
    diff = y_full - x
    assert bool(jnp.all(jnp.isfinite(diff)))
    assert float(jnp.abs(diff).max()) > 0.0
    assert float(jnp.abs(diff).max()) < 5.0 * math.sqrt(0.1) + 1e-3
    # Eval mode is exact identity.
    assert bool(jnp.all(y_eval == x))
    # Compact-mask bf16 path: dtype preserved, masked-off rows bit-exact.
    assert y2.shape == x2.shape and y2.dtype == x2.dtype
    mask3b = jnp.broadcast_to(where[..., None], x2.shape)
    assert bool(jnp.all(jnp.where(mask3b, True, y2 == x2)))

    print("KERNEL_OK")
</pallas_src>

<mosaic_0001>
module attributes {stable_mosaic.version = 11 : i64} {
  func.func @_masked_noise_kernel(%arg0: i32, %arg1: memref<1x512xi8, #tpu.memory_space<vmem>>, %arg2: memref<1x512xf32, #tpu.memory_space<vmem>>, %arg3: memref<1x512xf32, #tpu.memory_space<vmem>>) attributes {dimension_semantics = [#tpu.dimension_semantics<parallel>], iteration_bounds = array<i64: 1>, scalar_prefetch = 0 : i64, scratch_operands = 0 : i64, tpu.core_type = #tpu.core_type<tc>, window_params = [{transform_indices = @transform_0, window_bounds = array<i64: 1, 512>}, {transform_indices = @transform_1, window_bounds = array<i64: 1, 512>}, {transform_indices = @transform_2, window_bounds = array<i64: 1, 512>}]} {
    %c512_i32 = arith.constant 512 : i32
    %0 = arith.muli %arg0, %c512_i32 : i32
    %1 = tpu.iota {dimensions = array<i32: 0>} : vector<1x512xi32>
    %2 = tpu.iota {dimensions = array<i32: 1>} : vector<1x512xi32>
    %c512_i32_0 = arith.constant 512 : i32
    %3 = vector.broadcast %c512_i32_0 : i32 to vector<1x512xi32>
    %4 = arith.muli %1, %3 : vector<1x512xi32>
    %5 = vector.broadcast %0 : i32 to vector<1x512xi32>
    %6 = arith.addi %5, %4 : vector<1x512xi32>
    %7 = arith.addi %6, %2 : vector<1x512xi32>
    %c1_i32 = arith.constant 1 : i32
    %8 = vector.broadcast %c1_i32 : i32 to vector<1x512xi32>
    %9 = arith.shli %7, %8 : vector<1x512xi32>
    %c1534179274_i32 = arith.constant 1534179274 : i32
    %10 = vector.broadcast %c1534179274_i32 : i32 to vector<1x512xi32>
    %11 = arith.xori %9, %10 : vector<1x512xi32>
    %c16_i32 = arith.constant 16 : i32
    %12 = vector.broadcast %c16_i32 : i32 to vector<1x512xi32>
    %13 = arith.shrui %11, %12 : vector<1x512xi32>
    %14 = arith.xori %11, %13 : vector<1x512xi32>
    %c2146121005_i32 = arith.constant 2146121005 : i32
    %15 = vector.broadcast %c2146121005_i32 : i32 to vector<1x512xi32>
    %16 = arith.muli %14, %15 : vector<1x512xi32>
    %c15_i32 = arith.constant 15 : i32
    %17 = vector.broadcast %c15_i32 : i32 to vector<1x512xi32>
    %18 = arith.shrui %16, %17 : vector<1x512xi32>
    %19 = arith.xori %16, %18 : vector<1x512xi32>
    %c-2073254261_i32 = arith.constant -2073254261 : i32
    %20 = vector.broadcast %c-2073254261_i32 : i32 to vector<1x512xi32>
    %21 = arith.muli %19, %20 : vector<1x512xi32>
    %c16_i32_1 = arith.constant 16 : i32
    %22 = vector.broadcast %c16_i32_1 : i32 to vector<1x512xi32>
    %23 = arith.shrui %21, %22 : vector<1x512xi32>
    %24 = arith.xori %21, %23 : vector<1x512xi32>
    %c8388607_i32 = arith.constant 8388607 : i32
    %25 = vector.broadcast %c8388607_i32 : i32 to vector<1x512xi32>
    %26 = arith.andi %24, %25 : vector<1x512xi32>
    %27 = arith.sitofp %26 : vector<1x512xi32> to vector<1x512xf32>
    %cst = arith.constant 5.000000e-01 : f32
    %28 = vector.broadcast %cst : f32 to vector<1x512xf32>
    %29 = arith.addf %27, %28 : vector<1x512xf32>
    %cst_2 = arith.constant 1.1920929E-7 : f32
    %30 = vector.broadcast %cst_2 : f32 to vector<1x512xf32>
    %31 = arith.mulf %29, %30 : vector<1x512xf32>
    %c1_i32_3 = arith.constant 1 : i32
    %32 = vector.broadcast %c1_i32_3 : i32 to vector<1x512xi32>
    %33 = arith.ori %9, %32 : vector<1x512xi32>
    %c1534179274_i32_4 = arith.constant 1534179274 : i32
    %34 = vector.broadcast %c1534179274_i32_4 : i32 to vector<1x512xi32>
    %35 = arith.xori %33, %34 : vector<1x512xi32>
    %c16_i32_5 = arith.constant 16 : i32
    %36 = vector.broadcast %c16_i32_5 : i32 to vector<1x512xi32>
    %37 = arith.shrui %35, %36 : vector<1x512xi32>
    %38 = arith.xori %35, %37 : vector<1x512xi32>
    %c2146121005_i32_6 = arith.constant 2146121005 : i32
    %39 = vector.broadcast %c2146121005_i32_6 : i32 to vector<1x512xi32>
    %40 = arith.muli %38, %39 : vector<1x512xi32>
    %c15_i32_7 = arith.constant 15 : i32
    %41 = vector.broadcast %c15_i32_7 : i32 to vector<1x512xi32>
    %42 = arith.shrui %40, %41 : vector<1x512xi32>
    %43 = arith.xori %40, %42 : vector<1x512xi32>
    %c-2073254261_i32_8 = arith.constant -2073254261 : i32
    %44 = vector.broadcast %c-2073254261_i32_8 : i32 to vector<1x512xi32>
    %45 = arith.muli %43, %44 : vector<1x512xi32>
    %c16_i32_9 = arith.constant 16 : i32
    %46 = vector.broadcast %c16_i32_9 : i32 to vector<1x512xi32>
    %47 = arith.shrui %45, %46 : vector<1x512xi32>
    %48 = arith.xori %45, %47 : vector<1x512xi32>
    %c8388607_i32_10 = arith.constant 8388607 : i32
    %49 = vector.broadcast %c8388607_i32_10 : i32 to vector<1x512xi32>
    %50 = arith.andi %48, %49 : vector<1x512xi32>
    %51 = arith.sitofp %50 : vector<1x512xi32> to vector<1x512xf32>
    %cst_11 = arith.constant 5.000000e-01 : f32
    %52 = vector.broadcast %cst_11 : f32 to vector<1x512xf32>
    %53 = arith.addf %51, %52 : vector<1x512xf32>
    %cst_12 = arith.constant 1.1920929E-7 : f32
    %54 = vector.broadcast %cst_12 : f32 to vector<1x512xf32>
    %55 = arith.mulf %53, %54 : vector<1x512xf32>
    %56 = math.log %31 : vector<1x512xf32>
    %cst_13 = arith.constant -2.000000e+00 : f32
    %57 = vector.broadcast %cst_13 : f32 to vector<1x512xf32>
    %58 = arith.mulf %57, %56 : vector<1x512xf32>
    %59 = math.sqrt %58 : vector<1x512xf32>
    %cst_14 = arith.constant 6.28318548 : f32
    %60 = vector.broadcast %cst_14 : f32 to vector<1x512xf32>
    %61 = arith.mulf %60, %55 : vector<1x512xf32>
    %62 = math.cos %61 : vector<1x512xf32>
    %63 = arith.mulf %59, %62 : vector<1x512xf32>
    %cst_15 = arith.constant 0.316227764 : f32
    %64 = vector.broadcast %cst_15 : f32 to vector<1x512xf32>
    %65 = arith.mulf %64, %63 : vector<1x512xf32>
    %cst_16 = arith.constant 0.000000e+00 : f32
    %66 = vector.broadcast %cst_16 : f32 to vector<1x512xf32>
    %67 = arith.addf %66, %65 : vector<1x512xf32>
    %c0 = arith.constant 0 : index
    %c0_17 = arith.constant 0 : index
    %68 = vector.load %arg2[%c0, %c0_17] : memref<1x512xf32, #tpu.memory_space<vmem>>, vector<1x512xf32>
    %69 = arith.addf %68, %67 : vector<1x512xf32>
    %c0_18 = arith.constant 0 : index
    %c0_19 = arith.constant 0 : index
    %70 = vector.load %arg1[%c0_18, %c0_19] : memref<1x512xi8, #tpu.memory_space<vmem>>, vector<1x512xi8>
    %c0_i8 = arith.constant 0 : i8
    %71 = vector.broadcast %c0_i8 : i8 to vector<1x512xi8>
    %72 = arith.cmpi ne, %70, %71 : vector<1x512xi8>
    %73 = arith.select %72, %69, %68 : vector<1x512xi1>, vector<1x512xf32>
    %c0_20 = arith.constant 0 : index
    %c0_21 = arith.constant 0 : index
    %74 = vector.load %arg3[%c0_20, %c0_21] : memref<1x512xf32, #tpu.memory_space<vmem>>, vector<1x512xf32>
    tpu.vector_store %arg3[%c0_20, %c0_21], %73 {strides = array<i32>} : memref<1x512xf32, #tpu.memory_space<vmem>>, vector<1x512xf32>,
    return
  }
  func.func @transform_0(%arg0: i32) -> (i32, i32) {
    %c0_i32 = arith.constant 0 : i32
    %c0_i32_0 = arith.constant 0 : i32
    return %arg0, %c0_i32 : i32, i32
  }
  func.func @transform_1(%arg0: i32) -> (i32, i32) {
    %c0_i32 = arith.constant 0 : i32
    %c0_i32_0 = arith.constant 0 : i32
    return %arg0, %c0_i32 : i32, i32
  }
  func.func @transform_2(%arg0: i32) -> (i32, i32) {
    %c0_i32 = arith.constant 0 : i32
    %c0_i32_0 = arith.constant 0 : i32
    return %arg0, %c0_i32 : i32, i32
  }
}

</mosaic_0001>

<llo_original>
// kernel: tpu_custom_call.1
$region0: #{tpu_custom_call.1}
  #allocation0 [shape = 'u32[]', space=smem, size = 0x4, offset = 0x4, fixed_abs, tag = 'smem constant byte address 0x4 - core index']
  #allocation1 [shape = 'u32[144,128]{1,0:T(1,128)}', space=vmem, size = 0x12000, scoped, tag = 'internal scratch']
  %s0 = inlined_call_operand.hbm [shape: s8[1,512], index: 0, kind: input, shape index: {}]
  %s1 = inlined_call_operand.hbm [shape: f32[1,512], index: 1, kind: input, shape index: {}]
  %s2 = inlined_call_operand.hbm [shape: f32[1,512], index: 2, kind: output, shape index: {}]
  %s3 = sld [smem:[#allocation0]]
  $region26: #{tpu_custom_call.1} parent=0
    _
  %s5 = ssub.s32 1, %s3
  %s6 = scalar_select 0, %s5, %s3
  $region1: #{tpu_custom_call.1} parent=0
    #allocation2 [shape = 'u8[2048]{0}', space=vmem, size = 0x800, scoped, tag = 'input window, operand 0, single buffered']
    #allocation3 [shape = 's32[1]{0}', space=sflag, size = 0x4, scoped, tag = 'scoped memory for tpu_custom_call.1']
    #allocation4 [shape = 's32[1]{0}', space=sflag, size = 0x4, scoped, tag = 'scoped memory for tpu_custom_call.1']
    #allocation5 [shape = 'u8[2048]{0}', space=vmem, size = 0x800, scoped, tag = 'input window, operand 1, single buffered']
    #allocation6 [shape = 's32[1]{0}', space=sflag, size = 0x4, scoped, tag = 'scoped memory for tpu_custom_call.1']
    #allocation7 [shape = 'u8[2048]{0}', space=vmem, size = 0x800, scoped, tag = 'output window, operand 0, single buffered']
    %7 = vsyncpa [#allocation3], 0
    %8 = vsyncpa [#allocation6], 0
    %9 = vsyncpa [#allocation4], 0
    // Predicated region
    $region2: #{tpu_custom_call.1} parent=1 // pred_check
      _
    $region3: #{tpu_custom_call.1} parent=1 // pred_check_branch
      %11 = sbr.rel (0) target = $region5
    $region4: #{tpu_custom_call.1} parent=1 // pred_region
      %s13 = ssub.s32 64, 64
      %14 = vsyncadd [#allocation3], %s13
      %s16 = sshll.u32 [#allocation2], 4
      %s17 = int_to_ptr.vmem [resolvable:$true] %s16
      %19 = dma.hbm_to_vmem [thread:$0]  %s0, 64, %s17, [#allocation3]
    $region5: #{tpu_custom_call.1} parent=1 // pred_fallthru
      _
    // Predicated region
    $region6: #{tpu_custom_call.1} parent=1 // pred_check
      _
    $region7: #{tpu_custom_call.1} parent=1 // pred_check_branch
      %21 = sbr.rel (0) target = $region9
    $region8: #{tpu_custom_call.1} parent=1 // pred_region
      %s23 = ssub.s32 64, 64
      %24 = vsyncadd [#allocation6], %s23
      %s26 = sshll.u32 [#allocation5], 4
      %s27 = int_to_ptr.vmem [resolvable:$true] %s26
      %29 = dma.hbm_to_vmem [thread:$0]  %s1, 64, %s27, [#allocation6]
    $region9: #{tpu_custom_call.1} parent=1 // pred_fallthru
      _
    // Predicated region
    $region10: #{tpu_custom_call.1} parent=1 // pred_check
      _
    $region11: #{tpu_custom_call.1} parent=1 // pred_check_branch
      %31 = sbr.rel (0) target = $region13
    $region12: #{tpu_custom_call.1} parent=1 // pred_region
      %32 = dma.done [#allocation3], 64
    $region13: #{tpu_custom_call.1} parent=1 // pred_fallthru
      _
    // Predicated region
    $region14: #{tpu_custom_call.1} parent=1 // pred_check
      _
    $region15: #{tpu_custom_call.1} parent=1 // pred_check_branch
      %34 = sbr.rel (0) target = $region17
    $region16: #{tpu_custom_call.1} parent=1 // pred_region
      %35 = dma.done [#allocation6], 64
    $region17: #{tpu_custom_call.1} parent=1 // pred_fallthru
      _
    %s38 = smul.u32 0, 512
    %v39 = vlaneseq
    %v40 = vshrl.u32 %v39, 7
    %v41 = vlaneseq
    %v42 = vand.u32 %v41, 127
    %v43 = vadd.s32 %v42, 128
    %v44 = vadd.s32 %v42, 256
    %v45 = vadd.s32 %v42, 384
    %v46 = vmul.u32 %v40, 512
    %v47 = vstv %s38
    %v48 = vadd.s32 %v47, %v46
    %v49 = vadd.s32 %v48, %v42
    %v50 = vadd.s32 %v48, %v43
    %v51 = vadd.s32 %v48, %v44
    %v52 = vadd.s32 %v48, %v45
    %v53 = vshll.u32 %v49, 1
    %v54 = vshll.u32 %v50, 1
    %v55 = vshll.u32 %v51, 1
    %v56 = vshll.u32 %v52, 1
    %v57 = vxor.u32 %v53, 1534179274
    %v58 = vxor.u32 %v54, 1534179274
    %v59 = vxor.u32 %v55, 1534179274
    %v60 = vxor.u32 %v56, 1534179274
    %v61 = vshrl.u32 %v57, 16
    %v62 = vshrl.u32 %v58, 16
    %v63 = vshrl.u32 %v59, 16
    %v64 = vshrl.u32 %v60, 16
    %v65 = vxor.u32 %v57, %v61
    %v66 = vxor.u32 %v58, %v62
    %v67 = vxor.u32 %v59, %v63
    %v68 = vxor.u32 %v60, %v64
    %v69 = vmul.u32 %v65, 2146121005
    %v70 = vmul.u32 %v66, 2146121005
    %v71 = vmul.u32 %v67, 2146121005
    %v72 = vmul.u32 %v68, 2146121005
    %v73 = vshrl.u32 %v69, 15
    %v74 = vshrl.u32 %v70, 15
    %v75 = vshrl.u32 %v71, 15
    %v76 = vshrl.u32 %v72, 15
    %v77 = vxor.u32 %v69, %v73
    %v78 = vxor.u32 %v70, %v74
    %v79 = vxor.u32 %v71, %v75
    %v80 = vxor.u32 %v72, %v76
    %v81 = vmul.u32 %v77, 2221713035
    %v82 = vmul.u32 %v78, 2221713035
    %v83 = vmul.u32 %v79, 2221713035
    %v84 = vmul.u32 %v80, 2221713035
    %v85 = vshrl.u32 %v81, 16
    %v86 = vshrl.u32 %v82, 16
    %v87 = vshrl.u32 %v83, 16
    %v88 = vshrl.u32 %v84, 16
    %v89 = vxor.u32 %v81, %v85
    %v90 = vxor.u32 %v82, %v86
    %v91 = vxor.u32 %v83, %v87
    %v92 = vxor.u32 %v84, %v88
    %v93 = vand.u32 %v89, 8388607
    %v94 = vand.u32 %v90, 8388607
    %v95 = vand.u32 %v91, 8388607
    %v96 = vand.u32 %v92, 8388607
    %v97 = vcvt.s32.f32 %v93
    %v98 = vcvt.s32.f32 %v94
    %v99 = vcvt.s32.f32 %v95
    %v100 = vcvt.s32.f32 %v96
    %v101 = vadd.f32 %v97, 0.5
    %v102 = vadd.f32 %v98, 0.5
    %v103 = vadd.f32 %v99, 0.5
    %v104 = vadd.f32 %v100, 0.5
    %v105 = vmul.f32 %v101, 1.1920929e-07
    %v106 = vmul.f32 %v102, 1.1920929e-07
    %v107 = vmul.f32 %v103, 1.1920929e-07
    %v108 = vmul.f32 %v104, 1.1920929e-07
    %v109 = vor.u32 %v53, 1
    %v110 = vor.u32 %v54, 1
    %v111 = vor.u32 %v55, 1
    %v112 = vor.u32 %v56, 1
    %v113 = vxor.u32 %v109, 1534179274
    %v114 = vxor.u32 %v110, 1534179274
    %v115 = vxor.u32 %v111, 1534179274
    %v116 = vxor.u32 %v112, 1534179274
    %v117 = vshrl.u32 %v113, 16
    %v118 = vshrl.u32 %v114, 16
    %v119 = vshrl.u32 %v115, 16
    %v120 = vshrl.u32 %v116, 16
    %v121 = vxor.u32 %v113, %v117
    %v122 = vxor.u32 %v114, %v118
    %v123 = vxor.u32 %v115, %v119
    %v124 = vxor.u32 %v116, %v120
    %v125 = vmul.u32 %v121, 2146121005
    %v126 = vmul.u32 %v122, 2146121005
    %v127 = vmul.u32 %v123, 2146121005
    %v128 = vmul.u32 %v124, 2146121005
    %v129 = vshrl.u32 %v125, 15
    %v130 = vshrl.u32 %v126, 15
    %v131 = vshrl.u32 %v127, 15
    %v132 = vshrl.u32 %v128, 15
    %v133 = vxor.u32 %v125, %v129
    %v134 = vxor.u32 %v126, %v130
    %v135 = vxor.u32 %v127, %v131
    %v136 = vxor.u32 %v128, %v132
    %v137 = vmul.u32 %v133, 2221713035
    %v138 = vmul.u32 %v134, 2221713035
    %v139 = vmul.u32 %v135, 2221713035
    %v140 = vmul.u32 %v136, 2221713035
    %v141 = vshrl.u32 %v137, 16
    %v142 = vshrl.u32 %v138, 16
    %v143 = vshrl.u32 %v139, 16
    %v144 = vshrl.u32 %v140, 16
    %v145 = vxor.u32 %v137, %v141
    %v146 = vxor.u32 %v138, %v142
    %v147 = vxor.u32 %v139, %v143
    %v148 = vxor.u32 %v140, %v144
    %v149 = vand.u32 %v145, 8388607
    %v150 = vand.u32 %v146, 8388607
    %v151 = vand.u32 %v147, 8388607
    %v152 = vand.u32 %v148, 8388607
    %v153 = vcvt.s32.f32 %v149
    %v154 = vcvt.s32.f32 %v150
    %v155 = vcvt.s32.f32 %v151
    %v156 = vcvt.s32.f32 %v152
    %v157 = vadd.f32 %v153, 0.5
    %v158 = vadd.f32 %v154, 0.5
    %v159 = vadd.f32 %v155, 0.5
    %v160 = vadd.f32 %v156, 0.5
    %v161 = vmul.f32 %v157, 1.1920929e-07
    %v162 = vmul.f32 %v158, 1.1920929e-07
    %v163 = vmul.f32 %v159, 1.1920929e-07
    %v164 = vmul.f32 %v160, 1.1920929e-07
    %v165 = vlog2.pop %v105
    %v166 = vmul.f32 %v165, 0.6931472
    %v167 = vlog2.pop %v106
    %v168 = vmul.f32 %v167, 0.6931472
    %v169 = vlog2.pop %v107
    %v170 = vmul.f32 %v169, 0.6931472
    %v171 = vlog2.pop %v108
    %v172 = vmul.f32 %v171, 0.6931472
    %v173 = vmul.f32 %v166, -2.0
    %v174 = vmul.f32 %v168, -2.0
    %v175 = vmul.f32 %v170, -2.0
    %v176 = vmul.f32 %v172, -2.0
    %v177 = vrsqrt.pop %v173
    %v178 = vmul.f32 %v173, %v177
    %vm179 = vcmp.eq.f32.partialorder %v173, inf
    %v180 = vsel %vm179, %v173, %v178
    %vm181 = vcmp.eq.f32.partialorder %v173, 0.0
    %v182 = vand.u32 %v173, 2147483648
    %v183 = vsel %vm181, %v182, %v180
    %v184 = vrsqrt.pop %v174
    %v185 = vmul.f32 %v174, %v184
    %vm186 = vcmp.eq.f32.partialorder %v174, inf
    %v187 = vsel %vm186, %v174, %v185
    %vm188 = vcmp.eq.f32.partialorder %v174, 0.0
    %v189 = vand.u32 %v174, 2147483648
    %v190 = vsel %vm188, %v189, %v187
    %v191 = vrsqrt.pop %v175
    %v192 = vmul.f32 %v175, %v191
    %vm193 = vcmp.eq.f32.partialorder %v175, inf
    %v194 = vsel %vm193, %v175, %v192
    %vm195 = vcmp.eq.f32.partialorder %v175, 0.0
    %v196 = vand.u32 %v175, 2147483648
    %v197 = vsel %vm195, %v196, %v194
    %v198 = vrsqrt.pop %v176
    %v199 = vmul.f32 %v176, %v198
    %vm200 = vcmp.eq.f32.partialorder %v176, inf
    %v201 = vsel %vm200, %v176, %v199
    %vm202 = vcmp.eq.f32.partialorder %v176, 0.0
    %v203 = vand.u32 %v176, 2147483648
    %v204 = vsel %vm202, %v203, %v201
    %v205 = vmul.f32 %v161, 6.2831855
    %v206 = vmul.f32 %v162, 6.2831855
    %v207 = vmul.f32 %v163, 6.2831855
    %v208 = vmul.f32 %v164, 6.2831855
    %v209 = vand.u32 2147483647, %v205
    %vm210 = vcmp.le.f32.partialorder %v209, 0.7853982
    %vm211 = vcmp.lt.s32.totalorder %v205, 0
    %v212 = vand.u32 %v205, 2139095040
    %v213 = vshrl.u32 %v212, 23
    %v214 = vsub.s32 %v213, 127
    %v215 = vand.u32 2147483647, %v205
    %v216 = vand.u32 %v215, 8388607
    %v217 = vor.u32 %v216, 8388608
    %v218 = vsub.s32 0, %v217
    %v219 = vadd.s32 %v214, 1
    %vm220 = vcmp.gt.s32.totalorder %v219, 0
    %v221 = vsel %vm220, %v219, 0
    %v222 = vshrl.u32 %v221, 5
    %v223 = vand.u32 %v221, 31
    %v224 = vsub.s32 32, %v223
    %v225 = vshrl.u32 683565275, %v224
    %v226 = vshll.u32 683565275, %v223
    %v227 = vshrl.u32 2475754826, %v224
    %v228 = vor.u32 %v226, %v227
    %v229 = vshll.u32 2475754826, %v223
    %v230 = vshrl.u32 2131351028, %v224
    %v231 = vor.u32 %v229, %v230
    %v232 = vshll.u32 2131351028, %v223
    %v233 = vshrl.u32 2102212464, %v224
    %v234 = vor.u32 %v232, %v233
    %v235 = vshll.u32 2102212464, %v223
    %v236 = vshrl.u32 920167782, %v224
    %v237 = vor.u32 %v235, %v236
    %v238 = vshll.u32 920167782, %v223
    %v239 = vshrl.u32 1326507024, %v224
    %v240 = vor.u32 %v238, %v239
    %vm241 = vcmp.lt.s32.totalorder %v222, 1
    %vm242 = vcmp.lt.s32.totalorder %v222, 2
    %vm243 = vcmp.lt.s32.totalorder %v222, 3
    %vm244 = vcmp.lt.s32.totalorder %v222, 4
    %v245 = vsel %vm241, %v225, %v228
    %v246 = vsel %vm244, %v234, 2102212464
    %v247 = vsel %vm243, %v231, %v246
    %v248 = vsel %vm242, %v245, %v247
    %v249 = vsel %vm241, %v228, %v231
    %v250 = vsel %vm244, %v237, 920167782
    %v251 = vsel %vm243, %v234, %v250
    %v252 = vsel %vm242, %v249, %v251
    %v253 = vsel %vm241, %v231, %v234
    %v254 = vsel %vm244, %v240, 1326507024
    %v255 = vsel %vm243, %v237, %v254
    %v256 = vsel %vm242, %v253, %v255
    %v257 = vshll.u32 %v217, 8
    %v258 = vmul.u32.u64.compose %v257, %v256
    %v259 = vextract.low.u32 %v258
    %v260 = vextract.high.u32 %v258
    %v261 = vmul.u32.u64.compose %v257, %v252
    %v262 = vextract.low.u32 %v261
    %v263 = vextract.high.u32 %v261
    %v264 = vmul.u32 %v257, %v248
    %v265 = vadd.s32 %v260, %v262
    %vm266 = vc.u32 %v260, %v262
    %v267 = vadd.s32 %v263, 1
    %v268 = vsel %vm266, %v267, %v263
    %v269 = vadd.s32 %v264, %v268
    %v270 = vadd.s32 %v269, 536870912
    %v271 = vshrl.u32 %v270, 30
    %v272 = vshll.u32 %v271, 30
    %v273 = vsub.s32 %v269, %v272
    %vm274 = vcmp.lt.s32.totalorder %v273, 0
    %v275 = vsub.s32 0, %v273
    %v276 = vsel %vm274, %v275, %v273
    %v277 = vclz %v276
    %v278 = vsub.s32 %v277, 2
    %vm279 = vcmp.gt.s32.totalorder 0, %v278
    %v280 = vsel %vm279, 0, %v278
    %v281 = vsub.s32 32, %v280
    %v282 = vshll.u32 %v273, %v280
    %v283 = vshrl.u32 %v265, %v281
    %v284 = vor.u32 %v282, %v283
    %v285 = vsub.s32 4294967266, %v280
    %v286 = vadd.s32 %v285, 127
    %v287 = vshll.u32 %v286, 23
    %v288 = vor.u32 4788187, %v287
    %v289 = vand.u32 2147483647, %v288
    %v291 = vcvt.s32.f32 %v284
    %v292 = vmul.f32 %v291, %v289
    %v293 = vxor.u32 %v292, 2147483648
    %v294 = vsel %vm211, %v293, %v292
    %v295 = vsub.s32 4, %v271
    %v296 = vsel %vm211, %v295, %v271
    %v297 = vsel %vm210, %v205, %v294
    %v298 = vsel %vm210, 0, %v296
    %v299 = vcosq.f32.pop %v297
    %v300 = vsinq.f32.pop %v297
    %vm301 = vweird.f32 %v205
    %v302 = vand.u32 %v298, 3
    %vm303 = vcmp.lt.s32.totalorder %v302, 2
    %vm304 = vcmp.eq.s32.totalorder %v302, 0
    %v305 = vxor.u32 %v300, 2147483648
    %v306 = vsel %vm304, %v299, %v305
    %vm307 = vcmp.eq.s32.totalorder %v302, 2
    %v308 = vxor.u32 %v299, 2147483648
    %v309 = vsel %vm307, %v308, %v300
    %v310 = vsel %vm303, %v306, %v309
    %v311 = vsel %vm301, nan, %v310
    %v312 = vand.u32 2147483647, %v206
    %vm313 = vcmp.le.f32.partialorder %v312, 0.7853982
    %vm314 = vcmp.lt.s32.totalorder %v206, 0
    %v315 = vand.u32 %v206, 2139095040
    %v316 = vshrl.u32 %v315, 23
    %v317 = vsub.s32 %v316, 127
    %v318 = vand.u32 2147483647, %v206
    %v319 = vand.u32 %v318, 8388607
    %v320 = vor.u32 %v319, 8388608
    %v321 = vsub.s32 0, %v320
    %v322 = vadd.s32 %v317, 1
    %vm323 = vcmp.gt.s32.totalorder %v322, 0
    %v324 = vsel %vm323, %v322, 0
    %v325 = vshrl.u32 %v324, 5
    %v326 = vand.u32 %v324, 31
    %v327 = vsub.s32 32, %v326
    %v328 = vshrl.u32 683565275, %v327
    %v329 = vshll.u32 683565275, %v326
    %v330 = vshrl.u32 2475754826, %v327
    %v331 = vor.u32 %v329, %v330
    %v332 = vshll.u32 2475754826, %v326
    %v333 = vshrl.u32 2131351028, %v327
    %v334 = vor.u32 %v332, %v333
    %v335 = vshll.u32 2131351028, %v326
    %v336 = vshrl.u32 2102212464, %v327
    %v337 = vor.u32 %v335, %v336
    %v338 = vshll.u32 2102212464, %v326
    %v339 = vshrl.u32 920167782, %v327
    %v340 = vor.u32 %v338, %v339
    %v341 = vshll.u32 920167782, %v326
    %v342 = vshrl.u32 1326507024, %v327
    %v343 = vor.u32 %v341, %v342
    %vm344 = vcmp.lt.s32.totalorder %v325, 1
    %vm345 = vcmp.lt.s32.totalorder %v325, 2
    %vm346 = vcmp.lt.s32.totalorder %v325, 3
    %vm347 = vcmp.lt.s32.totalorder %v325, 4
    %v348 = vsel %vm344, %v328, %v331
    %v349 = vsel %vm347, %v337, 2102212464
    %v350 = vsel %vm346, %v334, %v349
    %v351 = vsel %vm345, %v348, %v350
    %v352 = vsel %vm344, %v331, %v334
    %v353 = vsel %vm347, %v340, 920167782
    %v354 = vsel %vm346, %v337, %v353
    %v355 = vsel %vm345, %v352, %v354
    %v356 = vsel %vm344, %v334, %v337
    %v357 = vsel %vm347, %v343, 1326507024
    %v358 = vsel %vm346, %v340, %v357
    %v359 = vsel %vm345, %v356, %v358
    %v360 = vshll.u32 %v320, 8
    %v361 = vmul.u32.u64.compose %v360, %v359
    %v362 = vextract.low.u32 %v361
    %v363 = vextract.high.u32 %v361
    %v364 = vmul.u32.u64.compose %v360, %v355
    %v365 = vextract.low.u32 %v364
    %v366 = vextract.high.u32 %v364
    %v367 = vmul.u32 %v360, %v351
    %v368 = vadd.s32 %v363, %v365
    %vm369 = vc.u32 %v363, %v365
    %v370 = vadd.s32 %v366, 1
    %v371 = vsel %vm369, %v370, %v366
    %v372 = vadd.s32 %v367, %v371
    %v373 = vadd.s32 %v372, 536870912
    %v374 = vshrl.u32 %v373, 30
    %v375 = vshll.u32 %v374, 30
    %v376 = vsub.s32 %v372, %v375
    %vm377 = vcmp.lt.s32.totalorder %v376, 0
    %v378 = vsub.s32 0, %v376
    %v379 = vsel %vm377, %v378, %v376
    %v380 = vclz %v379
    %v381 = vsub.s32 %v380, 2
    %vm382 = vcmp.gt.s32.totalorder 0, %v381
    %v383 = vsel %vm382, 0, %v381
    %v384 = vsub.s32 32, %v383
    %v385 = vshll.u32 %v376, %v383
    %v386 = vshrl.u32 %v368, %v384
    %v387 = vor.u32 %v385, %v386
    %v388 = vsub.s32 4294967266, %v383
    %v389 = vadd.s32 %v388, 127
    %v390 = vshll.u32 %v389, 23
    %v391 = vor.u32 4788187, %v390
    %v392 = vand.u32 2147483647, %v391
    %v394 = vcvt.s32.f32 %v387
    %v395 = vmul.f32 %v394, %v392
    %v396 = vxor.u32 %v395, 2147483648
    %v397 = vsel %vm314, %v396, %v395
    %v398 = vsub.s32 4, %v374
    %v399 = vsel %vm314, %v398, %v374
    %v400 = vsel %vm313, %v206, %v397
    %v401 = vsel %vm313, 0, %v399
    %v402 = vcosq.f32.pop %v400
    %v403 = vsinq.f32.pop %v400
    %vm404 = vweird.f32 %v206
    %v405 = vand.u32 %v401, 3
    %vm406 = vcmp.lt.s32.totalorder %v405, 2
    %vm407 = vcmp.eq.s32.totalorder %v405, 0
    %v408 = vxor.u32 %v403, 2147483648
    %v409 = vsel %vm407, %v402, %v408
    %vm410 = vcmp.eq.s32.totalorder %v405, 2
    %v411 = vxor.u32 %v402, 2147483648
    %v412 = vsel %vm410, %v411, %v403
    %v413 = vsel %vm406, %v409, %v412
    %v414 = vsel %vm404, nan, %v413
    %v415 = vand.u32 2147483647, %v207
    %vm416 = vcmp.le.f32.partialorder %v415, 0.7853982
    %vm417 = vcmp.lt.s32.totalorder %v207, 0
    %v418 = vand.u32 %v207, 2139095040
    %v419 = vshrl.u32 %v418, 23
    %v420 = vsub.s32 %v419, 127
    %v421 = vand.u32 2147483647, %v207
    %v422 = vand.u32 %v421, 8388607
    %v423 = vor.u32 %v422, 8388608
    %v424 = vsub.s32 0, %v423
    %v425 = vadd.s32 %v420, 1
    %vm426 = vcmp.gt.s32.totalorder %v425, 0
    %v427 = vsel %vm426, %v425, 0
    %v428 = vshrl.u32 %v427, 5
    %v429 = vand.u32 %v427, 31
    %v430 = vsub.s32 32, %v429
    %v431 = vshrl.u32 683565275, %v430
    %v432 = vshll.u32 683565275, %v429
    %v433 = vshrl.u32 2475754826, %v430
    %v434 = vor.u32 %v432, %v433
    %v435 = vshll.u32 2475754826, %v429
    %v436 = vshrl.u32 2131351028, %v430
    %v437 = vor.u32 %v435, %v436
    %v438 = vshll.u32 2131351028, %v429
    %v439 = vshrl.u32 2102212464, %v430
    %v440 = vor.u32 %v438, %v439
    %v441 = vshll.u32 2102212464, %v429
    %v442 = vshrl.u32 920167782, %v430
    %v443 = vor.u32 %v441, %v442
    %v444 = vshll.u32 920167782, %v429
    %v445 = vshrl.u32 1326507024, %v430
    %v446 = vor.u32 %v444, %v445
    %vm447 = vcmp.lt.s32.totalorder %v428, 1
    %vm448 = vcmp.lt.s32.totalorder %v428, 2
    %vm449 = vcmp.lt.s32.totalorder %v428, 3
    %vm450 = vcmp.lt.s32.totalorder %v428, 4
    %v451 = vsel %vm447, %v431, %v434
    %v452 = vsel %vm450, %v440, 2102212464
    %v453 = vsel %vm449, %v437, %v452
    %v454 = vsel %vm448, %v451, %v453
    %v455 = vsel %vm447, %v434, %v437
    %v456 = vsel %vm450, %v443, 920167782
    %v457 = vsel %vm449, %v440, %v456
    %v458 = vsel %vm448, %v455, %v457
    %v459 = vsel %vm447, %v437, %v440
    %v460 = vsel %vm450, %v446, 1326507024
    %v461 = vsel %vm449, %v443, %v460
    %v462 = vsel %vm448, %v459, %v461
    %v463 = vshll.u32 %v423, 8
    %v464 = vmul.u32.u64.compose %v463, %v462
    %v465 = vextract.low.u32 %v464
    %v466 = vextract.high.u32 %v464
    %v467 = vmul.u32.u64.compose %v463, %v458
    %v468 = vextract.low.u32 %v467
    %v469 = vextract.high.u32 %v467
    %v470 = vmul.u32 %v463, %v454
    %v471 = vadd.s32 %v466, %v468
    %vm472 = vc.u32 %v466, %v468
    %v473 = vadd.s32 %v469, 1
    %v474 = vsel %vm472, %v473, %v469
    %v475 = vadd.s32 %v470, %v474
    %v476 = vadd.s32 %v475, 536870912
    %v477 = vshrl.u32 %v476, 30
    %v478 = vshll.u32 %v477, 30
    %v479 = vsub.s32 %v475, %v478
    %vm480 = vcmp.lt.s32.totalorder %v479, 0
    %v481 = vsub.s32 0, %v479
    %v482 = vsel %vm480, %v481, %v479
    %v483 = vclz %v482
    %v484 = vsub.s32 %v483, 2
    %vm485 = vcmp.gt.s32.totalorder 0, %v484
    %v486 = vsel %vm485, 0, %v484
    %v487 = vsub.s32 32, %v486
    %v488 = vshll.u32 %v479, %v486
    %v489 = vshrl.u32 %v471, %v487
    %v490 = vor.u32 %v488, %v489
    %v491 = vsub.s32 4294967266, %v486
    %v492 = vadd.s32 %v491, 127
    %v493 = vshll.u32 %v492, 23
    %v494 = vor.u32 4788187, %v493
    %v495 = vand.u32 2147483647, %v494
    %v497 = vcvt.s32.f32 %v490
    %v498 = vmul.f32 %v497, %v495
    %v499 = vxor.u32 %v498, 2147483648
    %v500 = vsel %vm417, %v499, %v498
    %v501 = vsub.s32 4, %v477
    %v502 = vsel %vm417, %v501, %v477
    %v503 = vsel %vm416, %v207, %v500
    %v504 = vsel %vm416, 0, %v502
    %v505 = vcosq.f32.pop %v503
    %v506 = vsinq.f32.pop %v503
    %vm507 = vweird.f32 %v207
    %v508 = vand.u32 %v504, 3
    %vm509 = vcmp.lt.s32.totalorder %v508, 2
    %vm510 = vcmp.eq.s32.totalorder %v508, 0
    %v511 = vxor.u32 %v506, 2147483648
    %v512 = vsel %vm510, %v505, %v511
    %vm513 = vcmp.eq.s32.totalorder %v508, 2
    %v514 = vxor.u32 %v505, 2147483648
    %v515 = vsel %vm513, %v514, %v506
    %v516 = vsel %vm509, %v512, %v515
    %v517 = vsel %vm507, nan, %v516
    %v518 = vand.u32 2147483647, %v208
    %vm519 = vcmp.le.f32.partialorder %v518, 0.7853982
    %vm520 = vcmp.lt.s32.totalorder %v208, 0
    %v521 = vand.u32 %v208, 2139095040
    %v522 = vshrl.u32 %v521, 23
    %v523 = vsub.s32 %v522, 127
    %v524 = vand.u32 2147483647, %v208
    %v525 = vand.u32 %v524, 8388607
    %v526 = vor.u32 %v525, 8388608
    %v527 = vsub.s32 0, %v526
    %v528 = vadd.s32 %v523, 1
    %vm529 = vcmp.gt.s32.totalorder %v528, 0
    %v530 = vsel %vm529, %v528, 0
    %v531 = vshrl.u32 %v530, 5
    %v532 = vand.u32 %v530, 31
    %v533 = vsub.s32 32, %v532
    %v534 = vshrl.u32 683565275, %v533
    %v535 = vshll.u32 683565275, %v532
    %v536 = vshrl.u32 2475754826, %v533
    %v537 = vor.u32 %v535, %v536
    %v538 = vshll.u32 2475754826, %v532
    %v539 = vshrl.u32 2131351028, %v533
    %v540 = vor.u32 %v538, %v539
    %v541 = vshll.u32 2131351028, %v532
    %v542 = vshrl.u32 2102212464, %v533
    %v543 = vor.u32 %v541, %v542
    %v544 = vshll.u32 2102212464, %v532
    %v545 = vshrl.u32 920167782, %v533
    %v546 = vor.u32 %v544, %v545
    %v547 = vshll.u32 920167782, %v532
    %v548 = vshrl.u32 1326507024, %v533
    %v549 = vor.u32 %v547, %v548
    %vm550 = vcmp.lt.s32.totalorder %v531, 1
    %vm551 = vcmp.lt.s32.totalorder %v531, 2
    %vm552 = vcmp.lt.s32.totalorder %v531, 3
    %vm553 = vcmp.lt.s32.totalorder %v531, 4
    %v554 = vsel %vm550, %v534, %v537
    %v555 = vsel %vm553, %v543, 2102212464
    %v556 = vsel %vm552, %v540, %v555
    %v557 = vsel %vm551, %v554, %v556
    %v558 = vsel %vm550, %v537, %v540
    %v559 = vsel %vm553, %v546, 920167782
    %v560 = vsel %vm552, %v543, %v559
    %v561 = vsel %vm551, %v558, %v560
    %v562 = vsel %vm550, %v540, %v543
    %v563 = vsel %vm553, %v549, 1326507024
    %v564 = vsel %vm552, %v546, %v563
    %v565 = vsel %vm551, %v562, %v564
    %v566 = vshll.u32 %v526, 8
    %v567 = vmul.u32.u64.compose %v566, %v565
    %v568 = vextract.low.u32 %v567
    %v569 = vextract.high.u32 %v567
    %v570 = vmul.u32.u64.compose %v566, %v561
    %v571 = vextract.low.u32 %v570
    %v572 = vextract.high.u32 %v570
    %v573 = vmul.u32 %v566, %v557
    %v574 = vadd.s32 %v569, %v571
    %vm575 = vc.u32 %v569, %v571
    %v576 = vadd.s32 %v572, 1
    %v577 = vsel %vm575, %v576, %v572
    %v578 = vadd.s32 %v573, %v577
    %v579 = vadd.s32 %v578, 536870912
    %v580 = vshrl.u32 %v579, 30
    %v581 = vshll.u32 %v580, 30
    %v582 = vsub.s32 %v578, %v581
    %vm583 = vcmp.lt.s32.totalorder %v582, 0
    %v584 = vsub.s32 0, %v582
    %v585 = vsel %vm583, %v584, %v582
    %v586 = vclz %v585
    %v587 = vsub.s32 %v586, 2
    %vm588 = vcmp.gt.s32.totalorder 0, %v587
    %v589 = vsel %vm588, 0, %v587
    %v590 = vsub.s32 32, %v589
    %v591 = vshll.u32 %v582, %v589
    %v592 = vshrl.u32 %v574, %v590
    %v593 = vor.u32 %v591, %v592
    %v594 = vsub.s32 4294967266, %v589
    %v595 = vadd.s32 %v594, 127
    %v596 = vshll.u32 %v595, 23
    %v597 = vor.u32 4788187, %v596
    %v598 = vand.u32 2147483647, %v597
    %v600 = vcvt.s32.f32 %v593
    %v601 = vmul.f32 %v600, %v598
    %v602 = vxor.u32 %v601, 2147483648
    %v603 = vsel %vm520, %v602, %v601
    %v604 = vsub.s32 4, %v580
    %v605 = vsel %vm520, %v604, %v580
    %v606 = vsel %vm519, %v208, %v603
    %v607 = vsel %vm519, 0, %v605
    %v608 = vcosq.f32.pop %v606
    %v609 = vsinq.f32.pop %v606
    %vm610 = vweird.f32 %v208
    %v611 = vand.u32 %v607, 3
    %vm612 = vcmp.lt.s32.totalorder %v611, 2
    %vm613 = vcmp.eq.s32.totalorder %v611, 0
    %v614 = vxor.u32 %v609, 2147483648
    %v615 = vsel %vm613, %v608, %v614
    %vm616 = vcmp.eq.s32.totalorder %v611, 2
    %v617 = vxor.u32 %v608, 2147483648
    %v618 = vsel %vm616, %v617, %v609
    %v619 = vsel %vm612, %v615, %v618
    %v620 = vsel %vm610, nan, %v619
    %v621 = vmul.f32 %v183, %v311
    %v622 = vmul.f32 %v190, %v414
    %v623 = vmul.f32 %v197, %v517
    %v624 = vmul.f32 %v204, %v620
    %v625 = vmul.f32 %v621, 0.31622776
    %v626 = vmul.f32 %v622, 0.31622776
    %v627 = vmul.f32 %v623, 0.31622776
    %v628 = vmul.f32 %v624, 0.31622776
    %v629 = vadd.f32 %v625, 0.0
    %v630 = vadd.f32 %v626, 0.0
    %v631 = vadd.f32 %v627, 0.0
    %v632 = vadd.f32 %v628, 0.0
    %v633 = vld [vmem:[#allocation5] sm:$0xf]
    %v638 = vcombine.low %v629, %v630
    %v639 = vcombine.low %v631, %v632
    %v641 = vunpack.c.l.s4 1966171168
    %v642 = vunpack.c.0.s8 %v641
    %v643 = vlaneseq
    %v644 = vshrl.u32 %v643, 7
    %v645 = vsub.s32 %v642, %v644
    %v646 = vrot.slane %v638, %v645
    %v648 = vunpack.c.l.s4 1966171168
    %v649 = vunpack.c.0.s8 %v648
    %v650 = vlaneseq
    %v651 = vshrl.u32 %v650, 7
    %v652 = vsub.s32 %v649, %v651
    %v653 = vrot.slane %v639, %v652
    %v654 = vcombine.low %v646, %v653
    %v656 = vunpack.c.l.s4 1966171168
    %v657 = vunpack.c.0.s8 %v656
    %v658 = vlaneseq
    %v659 = vshrl.u32 %v658, 7
    %v660 = vsub.s32 %v657, %v659
    %v661 = vrot.slane %v654, %v660
    %v663 = vadd.f32 %v633, %v661
    %v664 = vld [vmem:[#allocation2] sm:$0xf]
    %vm665 = vnez %v664
    %v666 = vsel %vm665, 16843009, 0
    %v667 = vunpack.c.0.s8 %v666
    %v668 = vunpack.c.1.s8 %v666
    %vm669 = vcmp.ne.s32.totalorder %v667, 0
    %vm670 = vcmp.ne.s32.totalorder %v668, 0
    %v671 = vsel %vm669, 1, 0
    %v672 = vsel %vm670, 1, 0
    %v674 = vunpack.c.l.s4 1966171168
    %v675 = vunpack.c.0.s8 %v674
    %v676 = vlaneseq
    %v677 = vshrl.u32 %v676, 7
    %v678 = vsub.s32 %v675, %v677
    %v679 = vrot.slane %v671, %v678
    %v681 = vunpack.c.l.s4 1966171168
    %v682 = vunpack.c.0.s8 %v681
    %v683 = vlaneseq
    %v684 = vshrl.u32 %v683, 7
    %v685 = vsub.s32 %v682, %v684
    %v686 = vrot.slane %v672, %v685
    %v687 = vcombine.low %v679, %v686
    %v689 = vunpack.c.l.s4 1966171168
    %v690 = vunpack.c.0.s8 %v689
    %v691 = vlaneseq
    %v692 = vshrl.u32 %v691, 7
    %v693 = vsub.s32 %v690, %v692
    %v694 = vrot.slane %v687, %v693
    %vm695 = vcmp.ne.s32.totalorder %v694, 0
    %v696 = vsel %vm695, %v663, %v633
    %v697 = vlaneseq
    %vm698 = vcmp.ge.s32.totalorder %v697, 0
    %vm699 = vcmp.lt.s32.totalorder %v697, 512
    %vm700 = vmand %vm698, %vm699
    %701 = vst.msk [vmem:[#allocation7] sm:$0xf] %vm700, %v696
    // Predicated region
    $region18: #{tpu_custom_call.1} parent=1 // pred_check
      _
    $region19: #{tpu_custom_call.1} parent=1 // pred_check_branch
      %703 = sbr.rel (0) target = $region21
    $region20: #{tpu_custom_call.1} parent=1 // pred_region
      %s705 = ssub.s32 64, 64
      %706 = vsyncadd [#allocation4], %s705
      %s708 = sshll.u32 [#allocation7], 4
      %s709 = int_to_ptr.vmem [resolvable:$true] %s708
      %711 = dma.vmem_to_hbm [thread:$0]  %s709, 64, %s2, [#allocation4]
    $region21: #{tpu_custom_call.1} parent=1 // pred_fallthru
      _
    // Predicated region
    $region22: #{tpu_custom_call.1} parent=1 // pred_check
      _
    $region23: #{tpu_custom_call.1} parent=1 // pred_check_branch
      %713 = sbr.rel (0) target = $region25
    $region24: #{tpu_custom_call.1} parent=1 // pred_region
      %714 = dma.done [#allocation4], 64
    $region25: #{tpu_custom_call.1} parent=1 // pred_fallthru
      _
    %715 = vsyncpa [#allocation3], 1
    %716 = vsyncpa [#allocation6], 1
    %717 = vsyncpa [#allocation4], 1

</llo_original>
